<compile_context>
chip_gen: v7x
topology: tpu7x:2x2x1
jax: 0.10.0
libtpu: 0.0.40
codegen_flags: <defaults>
</compile_context>

<pallas_src>
import functools

import jax
import jax.numpy as jnp
from jax import lax
from jax.experimental import pallas as pl
from jax.experimental.pallas import tpu as pltpu


def _poly_loss_kernel(n_ref, logits_ref, targets_ref, ce_out_ref, pt_out_ref,
                      ce_acc, pt_acc, *, tile_n: int, tiles_per_split: int):
    p = pl.program_id(0)          # core-split axis ("parallel")
    i = pl.program_id(1)          # row-tile axis ("arbitrary", accumulated)

    @pl.when(i == 0)
    def _init():
        ce_acc[...] = jnp.zeros_like(ce_acc)
        pt_acc[...] = jnp.zeros_like(pt_acc)

    x = logits_ref[...]           # (TN, C) in streamed dtype (no eager f32 widen)
    t = targets_ref[...]          # (TN, 1) int32
    tn, c = x.shape

    # Numerically stable log-sum-exp along the class (lane) axis.
    # max / subtract in the native dtype; exp / sum / log in f32.
    row_max = jnp.max(x, axis=1, keepdims=True)                         # (TN, 1)
    sum_ex = jnp.sum(jnp.exp((x - row_max).astype(jnp.float32)),
                     axis=1, keepdims=True)                              # (TN, 1) f32
    log_sum_ex = jnp.log(sum_ex)                                         # (TN, 1) f32

    # x[t] via masked select on the unshifted tile (exactly one nonzero per row).
    class_ids = lax.broadcasted_iota(jnp.int32, (tn, c), 1)
    x_t = jnp.sum(
        jnp.where(class_ids == t, x, jnp.zeros((), x.dtype)).astype(jnp.float32),
        axis=1, keepdims=True)                                           # (TN, 1) f32

    ce_row = row_max.astype(jnp.float32) + log_sum_ex - x_t   # -log_softmax(x)[t] >= 0
    pt_row = jnp.exp(-ce_row)                                  # softmax(x)[t]

    # Mask rows that are wrapper-side padding (global row index >= n_valid).
    blk = p * tiles_per_split + i
    row_ids = blk * tile_n + lax.broadcasted_iota(jnp.int32, (tn, 1), 0)
    valid = (row_ids < n_ref[0]).astype(jnp.float32)

    ce_acc[...] += jnp.sum(ce_row * valid, keepdims=True)
    pt_acc[...] += jnp.sum(pt_row * valid, keepdims=True)

    @pl.when(i == pl.num_programs(1) - 1)
    def _finalize():
        ce_out_ref[...] = ce_acc[...].reshape(1, 1, 1)
        pt_out_ref[...] = pt_acc[...].reshape(1, 1, 1)


def _round_up(x: int, m: int) -> int:
    return (x + m - 1) // m * m


def _vmem_capacity_bytes() -> int:
    try:
        return int(pltpu.get_tpu_info().vmem_capacity_bytes)
    except Exception:
        return 64 * 1024 * 1024   # conservative fallback: v7x per-TensorCore VMEM


def poly_loss(logits: jax.Array, targets: jax.Array, epsilon: float = 2.0,
              tile_n: int = 512, num_core_splits: int = 2) -> jax.Array:
    """PolyLoss forward. logits: (N, C) float, targets: (N,) int."""
    n, c = logits.shape
    targets_2d = targets.astype(jnp.int32).reshape(n, 1)
    itemsize = jnp.dtype(logits.dtype).itemsize

    # Generation/dtype-aware tile budget: double-buffered DMA pair at the input
    # itemsize plus ~3 f32 (TN,C) intermediates, on the lane-padded class dim.
    vmem_cap = _vmem_capacity_bytes()
    tile_budget = vmem_cap // 2                      # headroom for spill / misc
    c_pad = _round_up(c, 128)
    bytes_per_row = c_pad * (2 * itemsize + 3 * 4) + 64
    max_rows = max(8, (tile_budget // bytes_per_row) // 8 * 8)
    tn = min(_round_up(tile_n, 8), max_rows, _round_up(n, 8))

    num_tiles = -(-n // tn)
    splits = num_core_splits if num_tiles >= num_core_splits else 1
    tiles_per_split = -(-num_tiles // splits)
    n_pad = splits * tiles_per_split * tn
    if n_pad != n:
        logits = jnp.pad(logits, ((0, n_pad - n), (0, 0)))
        targets_2d = jnp.pad(targets_2d, ((0, n_pad - n), (0, 0)))

    n_valid = jnp.asarray([n], dtype=jnp.int32)
    vmem_limit = max(32 << 20, min(vmem_cap, int(vmem_cap * 0.75)))

    kernel = functools.partial(_poly_loss_kernel, tile_n=tn,
                               tiles_per_split=tiles_per_split)

    grid_spec = pltpu.PrefetchScalarGridSpec(
        num_scalar_prefetch=1,                      # n_valid -> SMEM scalar
        grid=(splits, tiles_per_split),
        in_specs=[
            pl.BlockSpec((tn, c), lambda p, i, nref: (p * tiles_per_split + i, 0)),
            pl.BlockSpec((tn, 1), lambda p, i, nref: (p * tiles_per_split + i, 0)),
        ],
        out_specs=[
            pl.BlockSpec((1, 1, 1), lambda p, i, nref: (p, 0, 0)),   # ce partial sums
            pl.BlockSpec((1, 1, 1), lambda p, i, nref: (p, 0, 0)),   # pt partial sums
        ],
        scratch_shapes=[
            pltpu.VMEM((1, 1), jnp.float32),        # running sum of ce (per core)
            pltpu.VMEM((1, 1), jnp.float32),        # running sum of pt (per core)
        ],
    )

    ce_parts, pt_parts = pl.pallas_call(
        kernel,
        out_shape=(jax.ShapeDtypeStruct((splits, 1, 1), jnp.float32),
                   jax.ShapeDtypeStruct((splits, 1, 1), jnp.float32)),
        grid_spec=grid_spec,
        compiler_params=pltpu.CompilerParams(
            dimension_semantics=("parallel", "arbitrary"),
            vmem_limit_bytes=vmem_limit,
        ),
    )(n_valid, logits, targets_2d)

    # Wrapper-side combine of the per-core partial sums (tiny XLA op).
    ce_sum = jnp.sum(ce_parts)
    pt_sum = jnp.sum(pt_parts)
    inv_n = jnp.float32(1.0) / jnp.float32(n)
    eps = jnp.float32(epsilon)
    return ce_sum * inv_n + eps * (jnp.float32(1.0) - pt_sum * inv_n)


def _reference_poly_loss(logits, targets, epsilon=2.0):
    # Pure-JAX reference replicating the PyTorch module exactly.
    x = logits.astype(jnp.float32)
    log_sm = jax.nn.log_softmax(x, axis=1)
    sm = jax.nn.softmax(x, axis=1)
    _, c = logits.shape
    onehot = jax.nn.one_hot(targets, c, dtype=jnp.float32)
    ce = -jnp.mean(jnp.sum(onehot * log_sm, axis=1))
    pt = jnp.sum(onehot * sm, axis=1)
    return jnp.mean(ce + epsilon * (1.0 - pt))


if __name__ == "__main__":
    key = jax.random.PRNGKey(0)
    k1, k2, k3, k4, k5, k6 = jax.random.split(key, 6)

    # 1) small classification shape: batch=8, classes=32 (single tile, single split)
    N, C = 8, 32
    logits = jax.random.normal(k1, (N, C), dtype=jnp.float32)
    targets = jax.random.randint(k2, (N,), 0, C, dtype=jnp.int32)
    loss = jax.block_until_ready(poly_loss(logits, targets, epsilon=2.0))
    ref = _reference_poly_loss(logits, targets, epsilon=2.0)
    assert jnp.allclose(loss, ref, atol=1e-5, rtol=1e-5), (loss, ref)

    # 2) multi-tile + ragged batch + 2-way core split (N not a multiple of tile size)
    N2, C2 = 200, 32
    logits2 = jax.random.normal(k3, (N2, C2), dtype=jnp.float32)
    targets2 = jax.random.randint(k4, (N2,), 0, C2, dtype=jnp.int32)
    loss2 = jax.block_until_ready(poly_loss(logits2, targets2, epsilon=2.0, tile_n=64))
    ref2 = _reference_poly_loss(logits2, targets2, epsilon=2.0)
    assert jnp.allclose(loss2, ref2, atol=1e-5, rtol=1e-5), (loss2, ref2)

    # 3) bf16 streamed dtype (max/subtract/select stay bf16; exp/sum/acc in f32)
    N3, C3 = 128, 32
    logits3 = jax.random.normal(k5, (N3, C3), dtype=jnp.bfloat16)
    targets3 = jax.random.randint(k6, (N3,), 0, C3, dtype=jnp.int32)
    loss3 = jax.block_until_ready(poly_loss(logits3, targets3, epsilon=2.0))
    ref3 = _reference_poly_loss(logits3, targets3, epsilon=2.0)
    assert jnp.allclose(loss3, ref3, atol=5e-2, rtol=5e-2), (loss3, ref3)

    print("KERNEL_OK")
</pallas_src>

<mosaic_0001>
module attributes {stable_mosaic.version = 11 : i64} {
  func.func @_poly_loss_kernel(%arg0: i32, %arg1: i32, %arg2: memref<1xi32, #tpu.memory_space<smem>>, %arg3: memref<8x32xf32, #tpu.memory_space<vmem>>, %arg4: memref<8x1xi32, #tpu.memory_space<vmem>>, %arg5: memref<1x1x1xf32, #tpu.memory_space<vmem>>, %arg6: memref<1x1x1xf32, #tpu.memory_space<vmem>>, %arg7: memref<1x1xf32, #tpu.memory_space<vmem>>, %arg8: memref<1x1xf32, #tpu.memory_space<vmem>>) attributes {dimension_semantics = [#tpu.dimension_semantics<parallel>, #tpu.dimension_semantics<arbitrary>], iteration_bounds = array<i64: 1, 1>, scalar_prefetch = 1 : i64, scratch_operands = 2 : i64, tpu.core_type = #tpu.core_type<tc>, window_params = [{transform_indices = @transform_0, window_bounds = array<i64: 8, 32>}, {transform_indices = @transform_1, window_bounds = array<i64: 8, 1>}, {transform_indices = @transform_2, window_bounds = array<i64: 1, 1, 1>}, {transform_indices = @transform_3, window_bounds = array<i64: 1, 1, 1>}]} {
    %c0_i32 = arith.constant 0 : i32
    %0 = arith.cmpi eq, %arg1, %c0_i32 : i32
    %1 = arith.extui %0 : i1 to i32
    %c0_i32_0 = arith.constant 0 : i32
    %2 = arith.cmpi ne, %1, %c0_i32_0 : i32
    scf.if %2 {
      %cst_21 = arith.constant 0.000000e+00 : f32
      %57 = vector.broadcast %cst_21 : f32 to vector<1x1xf32>
      %c0_22 = arith.constant 0 : index
      %c0_23 = arith.constant 0 : index
      %58 = vector.load %arg7[%c0_22, %c0_23] : memref<1x1xf32, #tpu.memory_space<vmem>>, vector<1x1xf32>
      tpu.vector_store %arg7[%c0_22, %c0_23], %57 {strides = array<i32>} : memref<1x1xf32, #tpu.memory_space<vmem>>, vector<1x1xf32>,
      %cst_24 = arith.constant 0.000000e+00 : f32
      %59 = vector.broadcast %cst_24 : f32 to vector<1x1xf32>
      %c0_25 = arith.constant 0 : index
      %c0_26 = arith.constant 0 : index
      %60 = vector.load %arg8[%c0_25, %c0_26] : memref<1x1xf32, #tpu.memory_space<vmem>>, vector<1x1xf32>
      tpu.vector_store %arg8[%c0_25, %c0_26], %59 {strides = array<i32>} : memref<1x1xf32, #tpu.memory_space<vmem>>, vector<1x1xf32>,
    } else {
    }
    %c0 = arith.constant 0 : index
    %c0_1 = arith.constant 0 : index
    %3 = vector.load %arg3[%c0, %c0_1] : memref<8x32xf32, #tpu.memory_space<vmem>>, vector<8x32xf32>
    %c0_2 = arith.constant 0 : index
    %c0_3 = arith.constant 0 : index
    %4 = vector.load %arg4[%c0_2, %c0_3] : memref<8x1xi32, #tpu.memory_space<vmem>>, vector<8x1xi32>
    %cst = arith.constant dense<0xFF800000> : vector<8xf32>
    %5 = vector.multi_reduction <maximumf>, %3, %cst [1] : vector<8x32xf32> to vector<8xf32>
    %6 = vector.shape_cast %5 : vector<8xf32> to vector<8x1xf32>
    %7 = vector.broadcast %6 : vector<8x1xf32> to vector<8x32xf32>
    %8 = arith.subf %3, %7 : vector<8x32xf32>
    %9 = math.exp %8 : vector<8x32xf32>
    %cst_4 = arith.constant dense<0.000000e+00> : vector<8xf32>
    %10 = vector.multi_reduction <add>, %9, %cst_4 [1] : vector<8x32xf32> to vector<8xf32>
    %11 = vector.shape_cast %10 : vector<8xf32> to vector<8x1xf32>
    %12 = math.log %11 : vector<8x1xf32>
    %13 = tpu.iota {dimensions = array<i32: 1>} : vector<8x32xi32>
    %14 = vector.broadcast %4 : vector<8x1xi32> to vector<8x32xi32>
    %15 = arith.cmpi eq, %13, %14 : vector<8x32xi32>
    %cst_5 = arith.constant 0.000000e+00 : f32
    %16 = vector.broadcast %cst_5 : f32 to vector<8x32xf32>
    %17 = arith.select %15, %3, %16 : vector<8x32xi1>, vector<8x32xf32>
    %cst_6 = arith.constant dense<0.000000e+00> : vector<8xf32>
    %18 = vector.multi_reduction <add>, %17, %cst_6 [1] : vector<8x32xf32> to vector<8xf32>
    %19 = vector.shape_cast %18 : vector<8xf32> to vector<8x1xf32>
    %20 = arith.addf %6, %12 : vector<8x1xf32>
    %21 = arith.subf %20, %19 : vector<8x1xf32>
    %cst_7 = arith.constant 0.000000e+00 : f32
    %22 = vector.broadcast %cst_7 : f32 to vector<8x1xf32>
    %23 = arith.subf %22, %21 : vector<8x1xf32>
    %24 = math.exp %23 : vector<8x1xf32>
    %c1_i32 = arith.constant 1 : i32
    %25 = arith.muli %arg0, %c1_i32 : i32
    %26 = arith.addi %25, %arg1 : i32
    %c8_i32 = arith.constant 8 : i32
    %27 = arith.muli %26, %c8_i32 : i32
    %28 = tpu.iota {dimensions = array<i32: 0>} : vector<8x1xi32>
    %29 = vector.broadcast %27 : i32 to vector<8x1xi32>
    %30 = arith.addi %29, %28 : vector<8x1xi32>
    %c0_8 = arith.constant 0 : index
    %31 = memref.load %arg2[%c0_8] : memref<1xi32, #tpu.memory_space<smem>>
    %32 = vector.broadcast %31 : i32 to vector<8x1xi32>
    %33 = arith.cmpi slt, %30, %32 : vector<8x1xi32>
    %34 = arith.extui %33 : vector<8x1xi1> to vector<8x1xi32>
    %35 = arith.sitofp %34 : vector<8x1xi32> to vector<8x1xf32>
    %c0_9 = arith.constant 0 : index
    %c0_10 = arith.constant 0 : index
    %36 = vector.load %arg7[%c0_9, %c0_10] : memref<1x1xf32, #tpu.memory_space<vmem>>, vector<1x1xf32>
    %37 = arith.mulf %21, %35 : vector<8x1xf32>
    %38 = vector.shape_cast %37 : vector<8x1xf32> to vector<1x8x1xf32>
    %cst_11 = arith.constant dense<0.000000e+00> : vector<1xf32>
    %39 = vector.multi_reduction <add>, %38, %cst_11 [1, 2] : vector<1x8x1xf32> to vector<1xf32>
    %40 = vector.shape_cast %39 : vector<1xf32> to vector<1x1x1xf32>
    %41 = vector.extract %40[0, 0, 0] : f32 from vector<1x1x1xf32>
    %42 = vector.broadcast %41 : f32 to vector<1x1xf32>
    %43 = arith.addf %36, %42 : vector<1x1xf32>
    %c0_12 = arith.constant 0 : index
    %c0_13 = arith.constant 0 : index
    %44 = vector.load %arg7[%c0_12, %c0_13] : memref<1x1xf32, #tpu.memory_space<vmem>>, vector<1x1xf32>
    tpu.vector_store %arg7[%c0_12, %c0_13], %43 {strides = array<i32>} : memref<1x1xf32, #tpu.memory_space<vmem>>, vector<1x1xf32>,
    %c0_14 = arith.constant 0 : index
    %c0_15 = arith.constant 0 : index
    %45 = vector.load %arg8[%c0_14, %c0_15] : memref<1x1xf32, #tpu.memory_space<vmem>>, vector<1x1xf32>
    %46 = arith.mulf %24, %35 : vector<8x1xf32>
    %47 = vector.shape_cast %46 : vector<8x1xf32> to vector<1x8x1xf32>
    %cst_16 = arith.constant dense<0.000000e+00> : vector<1xf32>
    %48 = vector.multi_reduction <add>, %47, %cst_16 [1, 2] : vector<1x8x1xf32> to vector<1xf32>
    %49 = vector.shape_cast %48 : vector<1xf32> to vector<1x1x1xf32>
    %50 = vector.extract %49[0, 0, 0] : f32 from vector<1x1x1xf32>
    %51 = vector.broadcast %50 : f32 to vector<1x1xf32>
    %52 = arith.addf %45, %51 : vector<1x1xf32>
    %c0_17 = arith.constant 0 : index
    %c0_18 = arith.constant 0 : index
    %53 = vector.load %arg8[%c0_17, %c0_18] : memref<1x1xf32, #tpu.memory_space<vmem>>, vector<1x1xf32>
    tpu.vector_store %arg8[%c0_17, %c0_18], %52 {strides = array<i32>} : memref<1x1xf32, #tpu.memory_space<vmem>>, vector<1x1xf32>,
    %c0_i32_19 = arith.constant 0 : i32
    %54 = arith.cmpi eq, %arg1, %c0_i32_19 : i32
    %55 = arith.extui %54 : i1 to i32
    %c0_i32_20 = arith.constant 0 : i32
    %56 = arith.cmpi ne, %55, %c0_i32_20 : i32
    scf.if %56 {
      %c0_21 = arith.constant 0 : index
      %c0_22 = arith.constant 0 : index
      %57 = vector.load %arg7[%c0_21, %c0_22] : memref<1x1xf32, #tpu.memory_space<vmem>>, vector<1x1xf32>
      %58 = vector.shape_cast %57 : vector<1x1xf32> to vector<1x1x1xf32>
      %c0_23 = arith.constant 0 : index
      %c0_24 = arith.constant 0 : index
      %c0_25 = arith.constant 0 : index
      %59 = vector.load %arg5[%c0_23, %c0_24, %c0_25] : memref<1x1x1xf32, #tpu.memory_space<vmem>>, vector<1x1x1xf32>
      tpu.vector_store %arg5[%c0_23, %c0_24, %c0_25], %58 {strides = array<i32>} : memref<1x1x1xf32, #tpu.memory_space<vmem>>, vector<1x1x1xf32>,
      %c0_26 = arith.constant 0 : index
      %c0_27 = arith.constant 0 : index
      %60 = vector.load %arg8[%c0_26, %c0_27] : memref<1x1xf32, #tpu.memory_space<vmem>>, vector<1x1xf32>
      %61 = vector.shape_cast %60 : vector<1x1xf32> to vector<1x1x1xf32>
      %c0_28 = arith.constant 0 : index
      %c0_29 = arith.constant 0 : index
      %c0_30 = arith.constant 0 : index
      %62 = vector.load %arg6[%c0_28, %c0_29, %c0_30] : memref<1x1x1xf32, #tpu.memory_space<vmem>>, vector<1x1x1xf32>
      tpu.vector_store %arg6[%c0_28, %c0_29, %c0_30], %61 {strides = array<i32>} : memref<1x1x1xf32, #tpu.memory_space<vmem>>, vector<1x1x1xf32>,
    } else {
    }
    return
  }
  func.func @transform_0(%arg0: i32, %arg1: i32, %arg2: memref<1xi32, #tpu.memory_space<smem>>) -> (i32, i32) {
    %c1_i32 = arith.constant 1 : i32
    %0 = arith.muli %arg0, %c1_i32 : i32
    %1 = arith.addi %0, %arg1 : i32
    %c0_i32 = arith.constant 0 : i32
    %c0_i32_0 = arith.constant 0 : i32
    return %1, %c0_i32 : i32, i32
  }
  func.func @transform_1(%arg0: i32, %arg1: i32, %arg2: memref<1xi32, #tpu.memory_space<smem>>) -> (i32, i32) {
    %c1_i32 = arith.constant 1 : i32
    %0 = arith.muli %arg0, %c1_i32 : i32
    %1 = arith.addi %0, %arg1 : i32
    %c0_i32 = arith.constant 0 : i32
    %c0_i32_0 = arith.constant 0 : i32
    return %1, %c0_i32 : i32, i32
  }
  func.func @transform_2(%arg0: i32, %arg1: i32, %arg2: memref<1xi32, #tpu.memory_space<smem>>) -> (i32, i32, i32) {
    %c0_i32 = arith.constant 0 : i32
    %c0_i32_0 = arith.constant 0 : i32
    %c0_i32_1 = arith.constant 0 : i32
    return %arg0, %c0_i32, %c0_i32_0 : i32, i32, i32
  }
  func.func @transform_3(%arg0: i32, %arg1: i32, %arg2: memref<1xi32, #tpu.memory_space<smem>>) -> (i32, i32, i32) {
    %c0_i32 = arith.constant 0 : i32
    %c0_i32_0 = arith.constant 0 : i32
    %c0_i32_1 = arith.constant 0 : i32
    return %arg0, %c0_i32, %c0_i32_0 : i32, i32, i32
  }
}

</mosaic_0001>

<llo_original>
// kernel: tpu_custom_call.1
$region0: #{tpu_custom_call.1}
  #allocation0 [shape = 'u32[]', space=smem, size = 0x4, offset = 0x4, fixed_abs, tag = 'smem constant byte address 0x4 - core index']
  #allocation1 [shape = 'u32[144,128]{1,0:T(1,128)}', space=vmem, size = 0x12000, scoped, tag = 'internal scratch']
  #allocation2 [shape = 'f32[1,1]{1,0:T(1,128)}', space=vmem, size = 0x200, scoped, tag = 'scratch operand']
  #allocation3 [shape = 'f32[1,1]{1,0:T(1,128)}', space=vmem, size = 0x200, scoped, tag = 'scratch operand']
  #allocation4 [shape = 's32[1]{0}', space=sflag, size = 0x4, scoped, tag = 'scoped memory for tpu_custom_call.1']
  #allocation5 [shape = 's32[1]{0:T(128)S(6)}', space=smem, size = 0x200, scoped, tag = 'prefetched SMEM operand 0']
  %s0 = inlined_call_operand.<no memory space> [shape: s32[1], index: 0, kind: input, shape index: {}]
  %s1 = inlined_call_operand.vmem [shape: f32[8,32], index: 1, kind: input, shape index: {}]
  %s2 = inlined_call_operand.vmem [shape: s32[8,1], index: 2, kind: input, shape index: {}]
  %s3 = inlined_call_operand.hbm [shape: f32[1,1,1], index: 3, kind: output, shape index: {0}]
  %s4 = inlined_call_operand.hbm [shape: f32[1,1,1], index: 4, kind: output, shape index: {1}]
  %5 = xla_tuple %s3, %s4
  %s6 = sld [smem:[#allocation0]]
  $region34: #{tpu_custom_call.1} parent=0
    _
  %s8 = ssub.s32 1, %s6
  %s9 = scalar_select 0, %s8, %s6
  %10 = sst [smem:[#allocation5]] %s0
  $region1: #{tpu_custom_call.1} parent=0
    #allocation6 [shape = 'u8[512]{0}', space=vmem, size = 0x400, scoped, tag = 'output window, operand 0, single buffered']
    #allocation7 [shape = 's32[1]{0}', space=sflag, size = 0x4, scoped, tag = 'scoped memory for tpu_custom_call.1']
    #allocation8 [shape = 'u8[512]{0}', space=vmem, size = 0x400, scoped, tag = 'output window, operand 1, single buffered']
    #allocation9 [shape = 's32[1]{0}', space=sflag, size = 0x4, scoped, tag = 'scoped memory for tpu_custom_call.1']
    %11 = vsyncpa [#allocation7], 0
    %12 = vsyncpa [#allocation9], 0
    // Predicated region
    $region2: #{tpu_custom_call.1} parent=1 // pred_check
      _
    $region3: #{tpu_custom_call.1} parent=1 // pred_check_branch
      %14 = sbr.rel (0) target = $region5
    $region4: #{tpu_custom_call.1} parent=1 // pred_region
      %s15 = sadd.s32 0, 0
      %p16 = scmp.lt.s32.totalorder %s15, 0
      %s17 = scalar_select %p16, %s15, 0
      %s18 = smul.addr %s17, 8
      %s19 = scalar_lea.vmem %s1, %s18
      %s20 = sadd.s32 0, 0
    $region5: #{tpu_custom_call.1} parent=1 // pred_fallthru
      _
    // Predicated region
    $region6: #{tpu_custom_call.1} parent=1 // pred_check
      _
    $region7: #{tpu_custom_call.1} parent=1 // pred_check_branch
      %22 = sbr.rel (0) target = $region9
    $region8: #{tpu_custom_call.1} parent=1 // pred_region
      %s23 = sadd.s32 0, 0
      %p24 = scmp.lt.s32.totalorder %s23, 0
      %s25 = scalar_select %p24, %s23, 0
      %s26 = smul.addr %s25, 8
      %s27 = scalar_lea.vmem %s2, %s26
      %s28 = sadd.s32 0, 0
    $region9: #{tpu_custom_call.1} parent=1 // pred_fallthru
      _
    %s29 = sadd.s32 0, 0
    %p30 = scmp.lt.s32.totalorder %s29, 0
    %s31 = scalar_select %p30, %s29, 0
    %s32 = smul.addr %s31, 8
    %s33 = scalar_lea.vmem %s1, %s32
    %s34 = sadd.s32 0, 0
    %p35 = scmp.lt.s32.totalorder %s34, 0
    %s36 = scalar_select %p35, %s34, 0
    %s37 = smul.addr %s36, 8
    %s38 = scalar_lea.vmem %s2, %s37
    %s39 = sadd.s32 0, 0
    %p40 = scmp.lt.s32.totalorder %s39, 0
    %s41 = scalar_select %p40, %s39, 0
    %s42 = smul.addr %s41, 8
    %s43 = scalar_lea.vmem %s1, %s42
    %s44 = sadd.s32 0, 0
    %s45 = sadd.s32 0, 0
    %p46 = scmp.lt.s32.totalorder %s45, 0
    %s47 = scalar_select %p46, %s45, 0
    %s48 = smul.addr %s47, 8
    %s49 = scalar_lea.vmem %s2, %s48
    %s50 = sadd.s32 0, 0
    %p51 = scmp.eq.s32.totalorder 0, 0
    // Predicated region
    $region10: #{tpu_custom_call.1} parent=1 // pred_check
      %p52 = pneg %p51
    $region11: #{tpu_custom_call.1} parent=1 // pred_check_branch
      %54 = sbr.rel (%p52) target = $region13
    $region12: #{tpu_custom_call.1} parent=1 // pred_region
      %vm55 = vcmask 0
      %56 = vst.msk [vmem:[#allocation2] sm:$0x1] %vm55, 0.0
      %57 = vst.msk [vmem:[#allocation3] sm:$0x1] %vm55, 0.0
    $region13: #{tpu_custom_call.1} parent=1 // pred_fallthru
      _
    %v58 = vld [vmem:[%s43] sm:$0xff]
    %v59 = vld [vmem:[%s49] sm:$0xff]
    %vm60 = vcmask 261120
    %v61 = vsel %vm60, %v58, -inf
    %62 = vmax.xlane.f32.xlu0 %v61
    %v63 = vpop.xlane.xlu0 %62
    %v64 = vsub.f32 %v58, %v63
    %v65 = vmul.f32 %v64, 1.442695
    %v66 = vpow.pop %v65
    %v67 = vsel %vm60, %v66, 0.0
    %68 = vadd.xlane.f32.xlu0 %v67
    %v69 = vpop.xlane.xlu0 %68
    %v70 = vlog2.pop %v69
    %v71 = vmul.f32 %v70, 0.6931472
    %v72 = vlaneseq
    %v73 = vand.u32 %v72, 127
    %74 = vset.pattern.permute.xlu0 0
    %75 = vperm.xlu0 %74, %v59
    %v76 = vpop.permute.xlu0 %75
    %vm77 = vcmp.eq.s32.totalorder %v73, %v76
    %v78 = vsel %vm77, %v58, 0.0
    %v79 = vsel %vm60, %v78, 0.0
    %80 = vadd.xlane.f32.xlu0 %v79
    %v81 = vpop.xlane.xlu0 %80
    %v82 = vadd.f32 %v63, %v71
    %v83 = vsub.f32 %v82, %v81
    %v84 = vsub.f32 0.0, %v83
    %v85 = vmul.f32 %v84, 1.442695
    %v86 = vpow.pop %v85
    %s87 = sadd.s32 0, 0
    %s88 = smul.u32 %s87, 8
    %v89 = vlaneseq
    %v90 = vshrl.u32 %v89, 7
    %v91 = vstv %s88
    %v92 = vadd.s32 %v91, %v90
    %s93 = sld [smem:[#allocation5]]
    %v94 = vstv %s93
    %vm95 = vcmp.lt.s32.totalorder %v92, %v94
    %v96 = vsel %vm95, 1, 0
    %v97 = vcvt.s32.f32 %v96
    %v98 = vld [vmem:[#allocation2] sm:$0x1]
    %v99 = vmul.f32 %v83, %v97
    %vm100 = vcmask 7168
    %v101 = vsel %vm100, %v99, 0.0
    %102 = vadd.xlane.f32.xlu0 %v101
    %v103 = vpop.xlane.xlu0 %102
    %v104 = vrot.slane %v103, 4
    %v105 = vadd.f32 %v103, %v104
    %v106 = vrot.slane %v105, 2
    %v107 = vadd.f32 %v105, %v106
    %v108 = vrot.slane %v107, 1
    %v109 = vadd.f32 %v107, %v108
    %s110 = vtos %v109
    %v111 = vstv %s110
    %v112 = vadd.f32 %v98, %v111
    %vm113 = vcmask 0
    %114 = vst.msk [vmem:[#allocation2] sm:$0x1] %vm113, %v112
    %v115 = vld [vmem:[#allocation3] sm:$0x1]
    %v116 = vmul.f32 %v86, %v97
    %v117 = vsel %vm100, %v116, 0.0
    %118 = vadd.xlane.f32.xlu0 %v117
    %v119 = vpop.xlane.xlu0 %118
    %v120 = vrot.slane %v119, 4
    %v121 = vadd.f32 %v119, %v120
    %v122 = vrot.slane %v121, 2
    %v123 = vadd.f32 %v121, %v122
    %v124 = vrot.slane %v123, 1
    %v125 = vadd.f32 %v123, %v124
    %s126 = vtos %v125
    %v127 = vstv %s126
    %v128 = vadd.f32 %v115, %v127
    %129 = vst.msk [vmem:[#allocation3] sm:$0x1] %vm113, %v128
    // Predicated region
    $region14: #{tpu_custom_call.1} parent=1 // pred_check
      %p130 = pneg %p51
    $region15: #{tpu_custom_call.1} parent=1 // pred_check_branch
      %132 = sbr.rel (%p130) target = $region17
    $region16: #{tpu_custom_call.1} parent=1 // pred_region
      %v133 = vld [vmem:[#allocation2] sm:$0x1]
      %134 = vst.msk [vmem:[#allocation6] sm:$0x1] %vm113, %v133
      %v135 = vld [vmem:[#allocation3] sm:$0x1]
      %136 = vst.msk [vmem:[#allocation8] sm:$0x1] %vm113, %v135
    $region17: #{tpu_custom_call.1} parent=1 // pred_fallthru
      _
    // Predicated region
    $region18: #{tpu_custom_call.1} parent=1 // pred_check
      _
    $region19: #{tpu_custom_call.1} parent=1 // pred_check_branch
      %138 = sbr.rel (0) target = $region21
    $region20: #{tpu_custom_call.1} parent=1 // pred_region
      %s140 = ssub.s32 16, 16
      %141 = vsyncadd [#allocation7], %s140
      %s143 = sshll.u32 [#allocation6], 4
      %s144 = int_to_ptr.vmem [resolvable:$true] %s143
      %146 = dma.vmem_to_hbm [thread:$0]  %s144, 16, %s3, [#allocation7]
    $region21: #{tpu_custom_call.1} parent=1 // pred_fallthru
      _
    // Predicated region
    $region22: #{tpu_custom_call.1} parent=1 // pred_check
      _
    $region23: #{tpu_custom_call.1} parent=1 // pred_check_branch
      %148 = sbr.rel (0) target = $region25
    $region24: #{tpu_custom_call.1} parent=1 // pred_region
      %s150 = ssub.s32 16, 16
      %151 = vsyncadd [#allocation9], %s150
      %s153 = sshll.u32 [#allocation8], 4
      %s154 = int_to_ptr.vmem [resolvable:$true] %s153
      %156 = dma.vmem_to_hbm [thread:$0]  %s154, 16, %s4, [#allocation9]
    $region25: #{tpu_custom_call.1} parent=1 // pred_fallthru
      _
    // Predicated region
    $region26: #{tpu_custom_call.1} parent=1 // pred_check
      _
    $region27: #{tpu_custom_call.1} parent=1 // pred_check_branch
      %158 = sbr.rel (0) target = $region29
    $region28: #{tpu_custom_call.1} parent=1 // pred_region
      %159 = dma.done [#allocation7], 16
    $region29: #{tpu_custom_call.1} parent=1 // pred_fallthru
      _
    // Predicated region
    $region30: #{tpu_custom_call.1} parent=1 // pred_check
      _
    $region31: #{tpu_custom_call.1} parent=1 // pred_check_branch
      %161 = sbr.rel (0) target = $region33
    $region32: #{tpu_custom_call.1} parent=1 // pred_region
      %162 = dma.done [#allocation9], 16
    $region33: #{tpu_custom_call.1} parent=1 // pred_fallthru
      _
    %163 = vsyncpa [#allocation7], 1
    %164 = vsyncpa [#allocation9], 1

</llo_original>
